<compile_context>
chip_gen: v5e
topology: v5e:2x2
jax: 0.10.0
libtpu: 0.0.40
codegen_flags: <defaults>
</compile_context>

<pallas_src>
import jax
import jax.numpy as jnp
from jax import lax
from jax.experimental import pallas as pl
from jax.experimental.pallas import tpu as pltpu

_EPS = 1e-5


# ---------------------------------------------------------------------------
# Kernel factory: one grid step = `batch_tile` images, processed as a single
# (batch_tile*H, W*C) lane-dense slab.
# ---------------------------------------------------------------------------
def _make_resblock_kernel(H, W, Cin, Cout, batch_tile, has_shortcut_conv):
    Kin = W * Cin
    Kout = W * Cout
    BH = batch_tile * H

    def kernel(*refs):
        if has_shortcut_conv:
            (x_ref, w1_ref, s1_ref, t1_ref, w2_ref, s2_ref, t2_ref,
             wsc_ref, ssc_ref, tsc_ref, o_ref) = refs
        else:
            (x_ref, w1_ref, s1_ref, t1_ref, w2_ref, s2_ref, t2_ref,
             o_ref) = refs

        # Per-image row-boundary masks, hoisted once per grid step (jnp.where
        # select is NaN-safe, unlike multiply-by-0 masking).  Row i of image b
        # is flat row b*H + i, so the "row above / below exists" condition is
        # on (row % H); this also keeps the rolls from leaking rows across
        # image boundaries inside the batch_tile slab.
        row = lax.broadcasted_iota(jnp.int32, (BH, 1), 0) % H
        has_up = row != 0
        has_dn = row != (H - 1)
        up_in = jnp.broadcast_to(has_up, (BH, Kin))
        dn_in = jnp.broadcast_to(has_dn, (BH, Kin))
        up_out = jnp.broadcast_to(has_up, (BH, Kout))
        dn_out = jnp.broadcast_to(has_dn, (BH, Kout))

        def conv3x3(x_f32, w_ref, m_up, m_dn):
            # x_f32: (BH, K) lane-dense activations, f32.
            # w_ref: (3, K, Kout) banded weights, bf16 (one band per dy).
            # Row taps via XLU sublane rotation (non-negative shifts) plus a
            # row-mask select; column taps live inside the banded weights.
            up = jnp.where(m_up, pltpu.roll(x_f32, 1, axis=0), 0.0)
            dn = jnp.where(m_dn, pltpu.roll(x_f32, BH - 1, axis=0), 0.0)
            acc = jnp.dot(up.astype(jnp.bfloat16), w_ref[0],
                          preferred_element_type=jnp.float32)
            acc += jnp.dot(x_f32.astype(jnp.bfloat16), w_ref[1],
                           preferred_element_type=jnp.float32)
            acc += jnp.dot(dn.astype(jnp.bfloat16), w_ref[2],
                           preferred_element_type=jnp.float32)
            return acc                                   # (BH, Kout) f32

        x_all = x_ref[...].reshape(BH, Kin)              # merge leading dims
        x_f32 = x_all.astype(jnp.float32)

        # ---- conv1 (3x3, pad 1) + BN1 + ReLU ------------------------------
        h1 = jnp.maximum(
            conv3x3(x_f32, w1_ref, up_in, dn_in) * s1_ref[...] + t1_ref[...],
            0.0)

        # ---- conv2 (3x3, pad 1) + BN2 (no ReLU yet) -----------------------
        main = (conv3x3(h1, w2_ref, up_out, dn_out)
                * s2_ref[...] + t2_ref[...])

        # ---- shortcut ------------------------------------------------------
        if has_shortcut_conv:
            sc = (jnp.dot(x_all, wsc_ref[...],
                          preferred_element_type=jnp.float32)
                  * ssc_ref[...] + tsc_ref[...])
        else:
            sc = x_f32                                   # identity, Kin == Kout

        out = jnp.maximum(main + sc, 0.0)
        o_ref[...] = out.reshape(batch_tile, H, Kout).astype(o_ref.dtype)

    return kernel


# ---------------------------------------------------------------------------
# Banded-weight construction (wrapper side, plain XLA).
# ---------------------------------------------------------------------------
def _band_conv3x3_weights(w_oihw, W):
    """PyTorch (Cout, Cin, 3, 3) conv weight -> (3, W*Cin, W*Cout) banded
    matmul weights for the lane-dense (row, W*C) layout.  Band dy satisfies
      (x_row_shifted_by_dy @ band[dy])[i, j*Cout+co]
          = sum_{dx, ci} x[i+dy-1, j+dx-1, ci] * w[co, ci, dy, dx]
    with out-of-range column taps simply omitted (i.e. zero padding)."""
    Cout, Cin, KH, KW = w_oihw.shape
    assert KH == 3 and KW == 3
    w_t = jnp.transpose(w_oihw, (2, 3, 1, 0)).astype(jnp.float32)  # (dy,dx,Ci,Co)
    bands = []
    for dy in range(3):
        m = jnp.zeros((W * Cin, W * Cout), jnp.float32)
        for dx in range(3):
            # output column j reads input column g = j + dx - 1
            sel = jnp.eye(W, W, k=1 - dx, dtype=jnp.float32)
            m = m + jnp.kron(sel, w_t[dy, dx])
        bands.append(m)
    return jnp.stack(bands).astype(jnp.bfloat16)          # (3, W*Cin, W*Cout)


def _band_conv1x1_weight(w_oi11, W):
    wt = jnp.transpose(w_oi11[:, :, 0, 0], (1, 0)).astype(jnp.float32)  # (Ci,Co)
    return jnp.kron(jnp.eye(W, dtype=jnp.float32), wt).astype(jnp.bfloat16)


# ---------------------------------------------------------------------------
# VMEM budgeting + batch_tile selection.
# ---------------------------------------------------------------------------
def _vmem_estimate_bytes(bt, H, W, Cin, Cout, x_bytes, has_sc):
    Kin, Kout = W * Cin, W * Cout
    BH = bt * H
    blk_in = BH * Kin * x_bytes
    blk_out = BH * Kout * 4
    weights = ((3 * Kin + 3 * Kout + (Kin if has_sc else 0)) * Kout * 2
               + 6 * Kout * 4)
    # live in-kernel temporaries: f32 + bf16 row taps, f32 accumulators and
    # epilogue values (rough upper bound).
    temps = BH * (3 * Kin + 3 * Kout) * 6 + 4 * BH * Kout * 4 + BH * Kin * 4
    # input/output blocks and the (constant) weights are double-buffered by
    # the BlockSpec pipeline.
    return 2 * (blk_in + blk_out + weights) + temps


def _pick_batch_tile(N, vmem_of_tile, budget_bytes=24 * 1024 * 1024,
                     preferred_steps=4):
    """Largest divisor of N whose VMEM estimate fits the budget while keeping
    >= preferred_steps grid steps (>= 2 per v7x TensorCore); relaxes to 2
    steps, then 1, when N is too small."""
    divisors = [d for d in range(1, N + 1) if N % d == 0]
    for steps in (preferred_steps, 2, 1):
        ok = [d for d in divisors
              if N // d >= steps and vmem_of_tile(d) <= budget_bytes]
        if ok:
            return max(ok)
    return 1


# ---------------------------------------------------------------------------
# Wrapper: NCHW in, NCHW out.  Folds BN/bias, builds banded weights, calls
# pallas_call.
# ---------------------------------------------------------------------------
def resblock_pallas(x_nchw, params, in_feat, out_feat, batch_tile=None):
    N, Cin, H, W = x_nchw.shape
    assert Cin == in_feat
    Cout = out_feat
    has_sc = (in_feat != out_feat)
    Kin, Kout = W * Cin, W * Cout
    x_bytes = 2 if has_sc else 4

    def vmem_of_tile(bt):
        return _vmem_estimate_bytes(bt, H, W, Cin, Cout, x_bytes, has_sc)

    if batch_tile is None:
        batch_tile = _pick_batch_tile(N, vmem_of_tile)
    assert N % batch_tile == 0
    vmem_limit = int(min(max(32 * 1024 * 1024, 2 * vmem_of_tile(batch_tile)),
                         128 * 1024 * 1024))

    # NCHW -> lane-dense (N, H, W*Cin) (wrapper-side XLA reshape/transpose).
    # TODO(synk): accept NHWC directly to drop this boundary transpose.
    x = jnp.transpose(x_nchw, (0, 2, 3, 1)).reshape(N, H, Kin)
    x = x.astype(jnp.bfloat16) if has_sc else x.astype(jnp.float32)

    def fold(bn, conv_bias):
        gamma, beta, mean, var = bn
        s = gamma / jnp.sqrt(var + _EPS)
        t = beta - mean * s + conv_bias * s
        # tile the per-channel scale/shift to the lane-dense (1, W*Cout) layout
        return (jnp.tile(s, W).reshape(1, Kout).astype(jnp.float32),
                jnp.tile(t, W).reshape(1, Kout).astype(jnp.float32))

    w1 = _band_conv3x3_weights(params['w1'], W)            # (3, Kin, Kout)
    w2 = _band_conv3x3_weights(params['w2'], W)            # (3, Kout, Kout)
    s1, t1 = fold(params['bn1'], params['b1'])
    s2, t2 = fold(params['bn2'], params['b2'])

    inputs = [x, w1, s1, t1, w2, s2, t2]
    in_specs = [
        pl.BlockSpec((batch_tile, H, Kin), lambda n: (n, 0, 0)),
        pl.BlockSpec((3, Kin, Kout), lambda n: (0, 0, 0)),
        pl.BlockSpec((1, Kout), lambda n: (0, 0)),
        pl.BlockSpec((1, Kout), lambda n: (0, 0)),
        pl.BlockSpec((3, Kout, Kout), lambda n: (0, 0, 0)),
        pl.BlockSpec((1, Kout), lambda n: (0, 0)),
        pl.BlockSpec((1, Kout), lambda n: (0, 0)),
    ]
    if has_sc:
        wsc = _band_conv1x1_weight(params['wsc'], W)        # (Kin, Kout)
        ssc, tsc = fold(params['bnsc'], params['bsc'])
        inputs += [wsc, ssc, tsc]
        in_specs += [
            pl.BlockSpec((Kin, Kout), lambda n: (0, 0)),
            pl.BlockSpec((1, Kout), lambda n: (0, 0)),
            pl.BlockSpec((1, Kout), lambda n: (0, 0)),
        ]

    grid_spec = pltpu.PrefetchScalarGridSpec(
        num_scalar_prefetch=0,
        grid=(N // batch_tile,),
        in_specs=in_specs,
        out_specs=pl.BlockSpec((batch_tile, H, Kout), lambda n: (n, 0, 0)),
    )

    kernel = _make_resblock_kernel(H, W, Cin, Cout, batch_tile, has_sc)
    out = pl.pallas_call(
        kernel,
        out_shape=jax.ShapeDtypeStruct((N, H, Kout), jnp.float32),
        grid_spec=grid_spec,
        compiler_params=pltpu.CompilerParams(
            dimension_semantics=("parallel",),
            vmem_limit_bytes=vmem_limit),
    )(*inputs)

    # lane-dense (N, H, W*Cout) -> NCHW
    return jnp.transpose(out.reshape(N, H, W, Cout), (0, 3, 1, 2))


# ---------------------------------------------------------------------------
# Deterministic parameter init (PyTorch Conv2d-style uniform fan-in bounds).
# ---------------------------------------------------------------------------
def init_params(key, in_feat, out_feat):
    ks = list(jax.random.split(key, 18))

    def conv_w(k, co, ci, kh, kw):
        bound = 1.0 / jnp.sqrt(ci * kh * kw)
        return jax.random.uniform(k, (co, ci, kh, kw), jnp.float32, -bound, bound)

    def conv_b(k, co, ci, kh, kw):
        bound = 1.0 / jnp.sqrt(ci * kh * kw)
        return jax.random.uniform(k, (co,), jnp.float32, -bound, bound)

    def bn(k0, k1, k2, k3, c):
        gamma = 1.0 + 0.1 * jax.random.normal(k0, (c,), jnp.float32)
        beta = 0.1 * jax.random.normal(k1, (c,), jnp.float32)
        mean = 0.1 * jax.random.normal(k2, (c,), jnp.float32)
        var = 1.0 + 0.5 * jax.random.uniform(k3, (c,), jnp.float32)
        return (gamma, beta, mean, var)

    p = {
        'w1': conv_w(ks[0], out_feat, in_feat, 3, 3),
        'b1': conv_b(ks[1], out_feat, in_feat, 3, 3),
        'bn1': bn(ks[2], ks[3], ks[4], ks[5], out_feat),
        'w2': conv_w(ks[6], out_feat, out_feat, 3, 3),
        'b2': conv_b(ks[7], out_feat, out_feat, 3, 3),
        'bn2': bn(ks[8], ks[9], ks[10], ks[11], out_feat),
    }
    if in_feat != out_feat:
        p['wsc'] = conv_w(ks[12], out_feat, in_feat, 1, 1)
        p['bsc'] = conv_b(ks[13], out_feat, in_feat, 1, 1)
        p['bnsc'] = bn(ks[14], ks[15], ks[16], ks[17], out_feat)
    return p


# ---------------------------------------------------------------------------
# Pure-JAX reference (eval-mode BN).  Mirrors the kernel's numerics: bf16 MXU
# operands, f32 accumulation, f32 BN/ReLU epilogue, f32 identity residual.
# ---------------------------------------------------------------------------
def resblock_ref(x, p, in_feat, out_feat):
    def conv(xx, w, b, pad):
        y = lax.conv_general_dilated(
            xx.astype(jnp.bfloat16), w.astype(jnp.bfloat16),
            window_strides=(1, 1), padding=[(pad, pad), (pad, pad)],
            dimension_numbers=('NCHW', 'OIHW', 'NCHW'),
            preferred_element_type=jnp.float32)
        return y + b[None, :, None, None]

    def bn(xx, stats):
        g, be, m, v = stats
        return ((xx - m[None, :, None, None])
                / jnp.sqrt(v[None, :, None, None] + _EPS)
                * g[None, :, None, None] + be[None, :, None, None])

    h = jnp.maximum(bn(conv(x, p['w1'], p['b1'], 1), p['bn1']), 0.0)
    h = bn(conv(h, p['w2'], p['b2'], 1), p['bn2'])
    if in_feat != out_feat:
        sc = bn(conv(x, p['wsc'], p['bsc'], 0), p['bnsc'])
    else:
        sc = x
    return jnp.maximum(h + sc, 0.0)


if __name__ == "__main__":
    key = jax.random.PRNGKey(0)
    kx, kp1, kp2 = jax.random.split(key, 3)

    N, Cin, Cout, H, W = 2, 4, 8, 16, 16
    x = jax.random.normal(kx, (N, Cin, H, W), jnp.float32)

    # Case 1: in_feat != out_feat (1x1 conv + BN shortcut)
    params = init_params(kp1, Cin, Cout)
    out = jax.block_until_ready(resblock_pallas(x, params, Cin, Cout))
    ref = resblock_ref(x, params, Cin, Cout)
    assert out.shape == (N, Cout, H, W)
    assert jnp.allclose(out, ref, atol=2e-2, rtol=2e-2), "mismatch (in != out)"

    # Case 2: in_feat == out_feat (identity shortcut)
    params_eq = init_params(kp2, Cin, Cin)
    out_eq = jax.block_until_ready(resblock_pallas(x, params_eq, Cin, Cin))
    ref_eq = resblock_ref(x, params_eq, Cin, Cin)
    assert out_eq.shape == (N, Cin, H, W)
    assert jnp.allclose(out_eq, ref_eq, atol=2e-2, rtol=2e-2), "mismatch (in == out)"

    print("KERNEL_OK")
</pallas_src>

<mosaic_0001>
module attributes {stable_mosaic.version = 11 : i64} {
  func.func @kernel(%arg0: i32, %arg1: memref<1x16x64xbf16, #tpu.memory_space<vmem>>, %arg2: memref<3x64x128xbf16, #tpu.memory_space<vmem>>, %arg3: memref<1x128xf32, #tpu.memory_space<vmem>>, %arg4: memref<1x128xf32, #tpu.memory_space<vmem>>, %arg5: memref<3x128x128xbf16, #tpu.memory_space<vmem>>, %arg6: memref<1x128xf32, #tpu.memory_space<vmem>>, %arg7: memref<1x128xf32, #tpu.memory_space<vmem>>, %arg8: memref<64x128xbf16, #tpu.memory_space<vmem>>, %arg9: memref<1x128xf32, #tpu.memory_space<vmem>>, %arg10: memref<1x128xf32, #tpu.memory_space<vmem>>, %arg11: memref<1x16x128xf32, #tpu.memory_space<vmem>>) attributes {dimension_semantics = [#tpu.dimension_semantics<parallel>], iteration_bounds = array<i64: 2>, scalar_prefetch = 0 : i64, scratch_operands = 0 : i64, tpu.core_type = #tpu.core_type<tc>, window_params = [{transform_indices = @transform_0, window_bounds = array<i64: 1, 16, 64>}, {pipeline_mode = #tpu.pipeline_mode<synchronous>, transform_indices = @transform_1, window_bounds = array<i64: 3, 64, 128>}, {pipeline_mode = #tpu.pipeline_mode<synchronous>, transform_indices = @transform_2, window_bounds = array<i64: 1, 128>}, {pipeline_mode = #tpu.pipeline_mode<synchronous>, transform_indices = @transform_3, window_bounds = array<i64: 1, 128>}, {pipeline_mode = #tpu.pipeline_mode<synchronous>, transform_indices = @transform_4, window_bounds = array<i64: 3, 128, 128>}, {pipeline_mode = #tpu.pipeline_mode<synchronous>, transform_indices = @transform_5, window_bounds = array<i64: 1, 128>}, {pipeline_mode = #tpu.pipeline_mode<synchronous>, transform_indices = @transform_6, window_bounds = array<i64: 1, 128>}, {pipeline_mode = #tpu.pipeline_mode<synchronous>, transform_indices = @transform_7, window_bounds = array<i64: 64, 128>}, {pipeline_mode = #tpu.pipeline_mode<synchronous>, transform_indices = @transform_8, window_bounds = array<i64: 1, 128>}, {pipeline_mode = #tpu.pipeline_mode<synchronous>, transform_indices = @transform_9, window_bounds = array<i64: 1, 128>}, {transform_indices = @transform_10, window_bounds = array<i64: 1, 16, 128>}]} {
    %0 = tpu.iota {dimensions = array<i32: 0>} : vector<16x1xi32>
    %c16_i32 = arith.constant 16 : i32
    %c0_i32 = arith.constant 0 : i32
    %1 = arith.cmpi eq, %c16_i32, %c0_i32 : i32
    %c1_i32 = arith.constant 1 : i32
    %2 = arith.select %1, %c1_i32, %c16_i32 : i32
    %3 = vector.broadcast %2 : i32 to vector<16x1xi32>
    %4 = arith.remsi %0, %3 : vector<16x1xi32>
    %c0_i32_0 = arith.constant 0 : i32
    %5 = vector.broadcast %c0_i32_0 : i32 to vector<16x1xi32>
    %6 = arith.cmpi ne, %4, %5 : vector<16x1xi32>
    %c0_i32_1 = arith.constant 0 : i32
    %7 = vector.broadcast %c0_i32_1 : i32 to vector<16x1xi32>
    %8 = arith.cmpi slt, %4, %7 : vector<16x1xi32>
    %c0_i32_2 = arith.constant 0 : i32
    %9 = arith.cmpi slt, %2, %c0_i32_2 : i32
    %10 = vector.broadcast %9 : i1 to vector<16x1xi1>
    %11 = vector.broadcast %10 : vector<16x1xi1> to vector<16x1xi1>
    %12 = arith.xori %8, %11 : vector<16x1xi1>
    %13 = arith.andi %12, %6 : vector<16x1xi1>
    %14 = vector.broadcast %2 : i32 to vector<16x1xi32>
    %15 = arith.addi %4, %14 : vector<16x1xi32>
    %16 = arith.select %13, %15, %4 : vector<16x1xi1>, vector<16x1xi32>
    %c0_i32_3 = arith.constant 0 : i32
    %17 = vector.broadcast %c0_i32_3 : i32 to vector<16x1xi32>
    %18 = arith.cmpi ne, %16, %17 : vector<16x1xi32>
    %c15_i32 = arith.constant 15 : i32
    %19 = vector.broadcast %c15_i32 : i32 to vector<16x1xi32>
    %20 = arith.cmpi ne, %16, %19 : vector<16x1xi32>
    %21 = vector.shape_cast %18 : vector<16x1xi1> to vector<16x1xi1>
    %22 = vector.broadcast %21 : vector<16x1xi1> to vector<16x64xi1>
    %23 = vector.shape_cast %20 : vector<16x1xi1> to vector<16x1xi1>
    %24 = vector.broadcast %23 : vector<16x1xi1> to vector<16x64xi1>
    %25 = vector.shape_cast %18 : vector<16x1xi1> to vector<16x1xi1>
    %26 = vector.broadcast %25 : vector<16x1xi1> to vector<16x128xi1>
    %27 = vector.shape_cast %20 : vector<16x1xi1> to vector<16x1xi1>
    %28 = vector.broadcast %27 : vector<16x1xi1> to vector<16x128xi1>
    %c0 = arith.constant 0 : index
    %c0_4 = arith.constant 0 : index
    %c0_5 = arith.constant 0 : index
    %29 = vector.load %arg1[%c0, %c0_4, %c0_5] : memref<1x16x64xbf16, #tpu.memory_space<vmem>>, vector<1x16x64xbf16>
    %30 = vector.shape_cast %29 : vector<1x16x64xbf16> to vector<16x64xbf16>
    %31 = arith.extf %30 : vector<16x64xbf16> to vector<16x64xf32>
    %c1_i32_6 = arith.constant 1 : i32
    %32 = tpu.dynamic_rotate %31 by %c1_i32_6 dim 0 : vector<16x64xf32>, i32 -> vector<16x64xf32>
    %cst = arith.constant 0.000000e+00 : f32
    %33 = vector.broadcast %cst : f32 to vector<16x64xf32>
    %34 = arith.select %22, %32, %33 : vector<16x64xi1>, vector<16x64xf32>
    %c15_i32_7 = arith.constant 15 : i32
    %35 = tpu.dynamic_rotate %31 by %c15_i32_7 dim 0 : vector<16x64xf32>, i32 -> vector<16x64xf32>
    %cst_8 = arith.constant 0.000000e+00 : f32
    %36 = vector.broadcast %cst_8 : f32 to vector<16x64xf32>
    %37 = arith.select %24, %35, %36 : vector<16x64xi1>, vector<16x64xf32>
    %38 = arith.truncf %34 : vector<16x64xf32> to vector<16x64xbf16>
    %c0_9 = arith.constant 0 : index
    %c0_10 = arith.constant 0 : index
    %c0_11 = arith.constant 0 : index
    %39 = vector.load %arg2[%c0_9, %c0_10, %c0_11] : memref<3x64x128xbf16, #tpu.memory_space<vmem>>, vector<1x64x128xbf16>
    %40 = vector.shape_cast %39 : vector<1x64x128xbf16> to vector<64x128xbf16>
    %cst_12 = arith.constant dense<0.000000e+00> : vector<16x128xf32>
    %41 = tpu.matmul %38, %40, %cst_12 {dimension_numbers = #tpu.dot_dimension_numbers<[1], [0], [0], [1], [0, 0, 1, 1], [], []>} : vector<16x64xbf16>, vector<64x128xbf16>, vector<16x128xf32> -> vector<16x128xf32>
    %42 = arith.truncf %31 : vector<16x64xf32> to vector<16x64xbf16>
    %c1 = arith.constant 1 : index
    %c0_13 = arith.constant 0 : index
    %c0_14 = arith.constant 0 : index
    %43 = vector.load %arg2[%c1, %c0_13, %c0_14] : memref<3x64x128xbf16, #tpu.memory_space<vmem>>, vector<1x64x128xbf16>
    %44 = vector.shape_cast %43 : vector<1x64x128xbf16> to vector<64x128xbf16>
    %cst_15 = arith.constant dense<0.000000e+00> : vector<16x128xf32>
    %45 = tpu.matmul %42, %44, %cst_15 {dimension_numbers = #tpu.dot_dimension_numbers<[1], [0], [0], [1], [0, 0, 1, 1], [], []>} : vector<16x64xbf16>, vector<64x128xbf16>, vector<16x128xf32> -> vector<16x128xf32>
    %46 = arith.addf %41, %45 : vector<16x128xf32>
    %47 = arith.truncf %37 : vector<16x64xf32> to vector<16x64xbf16>
    %c2 = arith.constant 2 : index
    %c0_16 = arith.constant 0 : index
    %c0_17 = arith.constant 0 : index
    %48 = vector.load %arg2[%c2, %c0_16, %c0_17] : memref<3x64x128xbf16, #tpu.memory_space<vmem>>, vector<1x64x128xbf16>
    %49 = vector.shape_cast %48 : vector<1x64x128xbf16> to vector<64x128xbf16>
    %cst_18 = arith.constant dense<0.000000e+00> : vector<16x128xf32>
    %50 = tpu.matmul %47, %49, %cst_18 {dimension_numbers = #tpu.dot_dimension_numbers<[1], [0], [0], [1], [0, 0, 1, 1], [], []>} : vector<16x64xbf16>, vector<64x128xbf16>, vector<16x128xf32> -> vector<16x128xf32>
    %51 = arith.addf %46, %50 : vector<16x128xf32>
    %c0_19 = arith.constant 0 : index
    %c0_20 = arith.constant 0 : index
    %52 = vector.load %arg3[%c0_19, %c0_20] : memref<1x128xf32, #tpu.memory_space<vmem>>, vector<1x128xf32>
    %53 = vector.broadcast %52 : vector<1x128xf32> to vector<16x128xf32>
    %54 = arith.mulf %51, %53 : vector<16x128xf32>
    %c0_21 = arith.constant 0 : index
    %c0_22 = arith.constant 0 : index
    %55 = vector.load %arg4[%c0_21, %c0_22] : memref<1x128xf32, #tpu.memory_space<vmem>>, vector<1x128xf32>
    %56 = vector.broadcast %55 : vector<1x128xf32> to vector<16x128xf32>
    %57 = arith.addf %54, %56 : vector<16x128xf32>
    %cst_23 = arith.constant 0.000000e+00 : f32
    %58 = vector.broadcast %cst_23 : f32 to vector<16x128xf32>
    %59 = arith.maximumf %57, %58 : vector<16x128xf32>
    %c1_i32_24 = arith.constant 1 : i32
    %60 = tpu.dynamic_rotate %59 by %c1_i32_24 dim 0 : vector<16x128xf32>, i32 -> vector<16x128xf32>
    %cst_25 = arith.constant 0.000000e+00 : f32
    %61 = vector.broadcast %cst_25 : f32 to vector<16x128xf32>
    %62 = arith.select %26, %60, %61 : vector<16x128xi1>, vector<16x128xf32>
    %c15_i32_26 = arith.constant 15 : i32
    %63 = tpu.dynamic_rotate %59 by %c15_i32_26 dim 0 : vector<16x128xf32>, i32 -> vector<16x128xf32>
    %cst_27 = arith.constant 0.000000e+00 : f32
    %64 = vector.broadcast %cst_27 : f32 to vector<16x128xf32>
    %65 = arith.select %28, %63, %64 : vector<16x128xi1>, vector<16x128xf32>
    %66 = arith.truncf %62 : vector<16x128xf32> to vector<16x128xbf16>
    %c0_28 = arith.constant 0 : index
    %c0_29 = arith.constant 0 : index
    %c0_30 = arith.constant 0 : index
    %67 = vector.load %arg5[%c0_28, %c0_29, %c0_30] : memref<3x128x128xbf16, #tpu.memory_space<vmem>>, vector<1x128x128xbf16>
    %68 = vector.shape_cast %67 : vector<1x128x128xbf16> to vector<128x128xbf16>
    %cst_31 = arith.constant dense<0.000000e+00> : vector<16x128xf32>
    %69 = tpu.matmul %66, %68, %cst_31 {dimension_numbers = #tpu.dot_dimension_numbers<[1], [0], [0], [1], [0, 0, 1, 1], [], []>} : vector<16x128xbf16>, vector<128x128xbf16>, vector<16x128xf32> -> vector<16x128xf32>
    %70 = arith.truncf %59 : vector<16x128xf32> to vector<16x128xbf16>
    %c1_32 = arith.constant 1 : index
    %c0_33 = arith.constant 0 : index
    %c0_34 = arith.constant 0 : index
    %71 = vector.load %arg5[%c1_32, %c0_33, %c0_34] : memref<3x128x128xbf16, #tpu.memory_space<vmem>>, vector<1x128x128xbf16>
    %72 = vector.shape_cast %71 : vector<1x128x128xbf16> to vector<128x128xbf16>
    %cst_35 = arith.constant dense<0.000000e+00> : vector<16x128xf32>
    %73 = tpu.matmul %70, %72, %cst_35 {dimension_numbers = #tpu.dot_dimension_numbers<[1], [0], [0], [1], [0, 0, 1, 1], [], []>} : vector<16x128xbf16>, vector<128x128xbf16>, vector<16x128xf32> -> vector<16x128xf32>
    %74 = arith.addf %69, %73 : vector<16x128xf32>
    %75 = arith.truncf %65 : vector<16x128xf32> to vector<16x128xbf16>
    %c2_36 = arith.constant 2 : index
    %c0_37 = arith.constant 0 : index
    %c0_38 = arith.constant 0 : index
    %76 = vector.load %arg5[%c2_36, %c0_37, %c0_38] : memref<3x128x128xbf16, #tpu.memory_space<vmem>>, vector<1x128x128xbf16>
    %77 = vector.shape_cast %76 : vector<1x128x128xbf16> to vector<128x128xbf16>
    %cst_39 = arith.constant dense<0.000000e+00> : vector<16x128xf32>
    %78 = tpu.matmul %75, %77, %cst_39 {dimension_numbers = #tpu.dot_dimension_numbers<[1], [0], [0], [1], [0, 0, 1, 1], [], []>} : vector<16x128xbf16>, vector<128x128xbf16>, vector<16x128xf32> -> vector<16x128xf32>
    %79 = arith.addf %74, %78 : vector<16x128xf32>
    %c0_40 = arith.constant 0 : index
    %c0_41 = arith.constant 0 : index
    %80 = vector.load %arg6[%c0_40, %c0_41] : memref<1x128xf32, #tpu.memory_space<vmem>>, vector<1x128xf32>
    %81 = vector.broadcast %80 : vector<1x128xf32> to vector<16x128xf32>
    %82 = arith.mulf %79, %81 : vector<16x128xf32>
    %c0_42 = arith.constant 0 : index
    %c0_43 = arith.constant 0 : index
    %83 = vector.load %arg7[%c0_42, %c0_43] : memref<1x128xf32, #tpu.memory_space<vmem>>, vector<1x128xf32>
    %84 = vector.broadcast %83 : vector<1x128xf32> to vector<16x128xf32>
    %85 = arith.addf %82, %84 : vector<16x128xf32>
    %c0_44 = arith.constant 0 : index
    %c0_45 = arith.constant 0 : index
    %86 = vector.load %arg8[%c0_44, %c0_45] : memref<64x128xbf16, #tpu.memory_space<vmem>>, vector<64x128xbf16>
    %cst_46 = arith.constant dense<0.000000e+00> : vector<16x128xf32>
    %87 = tpu.matmul %30, %86, %cst_46 {dimension_numbers = #tpu.dot_dimension_numbers<[1], [0], [0], [1], [0, 0, 1, 1], [], []>} : vector<16x64xbf16>, vector<64x128xbf16>, vector<16x128xf32> -> vector<16x128xf32>
    %c0_47 = arith.constant 0 : index
    %c0_48 = arith.constant 0 : index
    %88 = vector.load %arg9[%c0_47, %c0_48] : memref<1x128xf32, #tpu.memory_space<vmem>>, vector<1x128xf32>
    %89 = vector.broadcast %88 : vector<1x128xf32> to vector<16x128xf32>
    %90 = arith.mulf %87, %89 : vector<16x128xf32>
    %c0_49 = arith.constant 0 : index
    %c0_50 = arith.constant 0 : index
    %91 = vector.load %arg10[%c0_49, %c0_50] : memref<1x128xf32, #tpu.memory_space<vmem>>, vector<1x128xf32>
    %92 = vector.broadcast %91 : vector<1x128xf32> to vector<16x128xf32>
    %93 = arith.addf %90, %92 : vector<16x128xf32>
    %94 = arith.addf %85, %93 : vector<16x128xf32>
    %cst_51 = arith.constant 0.000000e+00 : f32
    %95 = vector.broadcast %cst_51 : f32 to vector<16x128xf32>
    %96 = arith.maximumf %94, %95 : vector<16x128xf32>
    %97 = vector.shape_cast %96 : vector<16x128xf32> to vector<1x16x128xf32>
    %c0_52 = arith.constant 0 : index
    %c0_53 = arith.constant 0 : index
    %c0_54 = arith.constant 0 : index
    %98 = vector.load %arg11[%c0_52, %c0_53, %c0_54] : memref<1x16x128xf32, #tpu.memory_space<vmem>>, vector<1x16x128xf32>
    tpu.vector_store %arg11[%c0_52, %c0_53, %c0_54], %97 {strides = array<i32>} : memref<1x16x128xf32, #tpu.memory_space<vmem>>, vector<1x16x128xf32>,
    return
  }
  func.func @transform_0(%arg0: i32) -> (i32, i32, i32) {
    %c0_i32 = arith.constant 0 : i32
    %c0_i32_0 = arith.constant 0 : i32
    %c0_i32_1 = arith.constant 0 : i32
    return %arg0, %c0_i32, %c0_i32_0 : i32, i32, i32
  }
  func.func @transform_1(%arg0: i32) -> (i32, i32, i32) {
    %c0_i32 = arith.constant 0 : i32
    %c0_i32_0 = arith.constant 0 : i32
    %c0_i32_1 = arith.constant 0 : i32
    %c0_i32_2 = arith.constant 0 : i32
    return %c0_i32, %c0_i32_0, %c0_i32_1 : i32, i32, i32
  }
  func.func @transform_2(%arg0: i32) -> (i32, i32) {
    %c0_i32 = arith.constant 0 : i32
    %c0_i32_0 = arith.constant 0 : i32
    %c0_i32_1 = arith.constant 0 : i32
    return %c0_i32, %c0_i32_0 : i32, i32
  }
  func.func @transform_3(%arg0: i32) -> (i32, i32) {
    %c0_i32 = arith.constant 0 : i32
    %c0_i32_0 = arith.constant 0 : i32
    %c0_i32_1 = arith.constant 0 : i32
    return %c0_i32, %c0_i32_0 : i32, i32
  }
  func.func @transform_4(%arg0: i32) -> (i32, i32, i32) {
    %c0_i32 = arith.constant 0 : i32
    %c0_i32_0 = arith.constant 0 : i32
    %c0_i32_1 = arith.constant 0 : i32
    %c0_i32_2 = arith.constant 0 : i32
    return %c0_i32, %c0_i32_0, %c0_i32_1 : i32, i32, i32
  }
  func.func @transform_5(%arg0: i32) -> (i32, i32) {
    %c0_i32 = arith.constant 0 : i32
    %c0_i32_0 = arith.constant 0 : i32
    %c0_i32_1 = arith.constant 0 : i32
    return %c0_i32, %c0_i32_0 : i32, i32
  }
  func.func @transform_6(%arg0: i32) -> (i32, i32) {
    %c0_i32 = arith.constant 0 : i32
    %c0_i32_0 = arith.constant 0 : i32
    %c0_i32_1 = arith.constant 0 : i32
    return %c0_i32, %c0_i32_0 : i32, i32
  }
  func.func @transform_7(%arg0: i32) -> (i32, i32) {
    %c0_i32 = arith.constant 0 : i32
    %c0_i32_0 = arith.constant 0 : i32
    %c0_i32_1 = arith.constant 0 : i32
    return %c0_i32, %c0_i32_0 : i32, i32
  }
  func.func @transform_8(%arg0: i32) -> (i32, i32) {
    %c0_i32 = arith.constant 0 : i32
    %c0_i32_0 = arith.constant 0 : i32
    %c0_i32_1 = arith.constant 0 : i32
    return %c0_i32, %c0_i32_0 : i32, i32
  }
  func.func @transform_9(%arg0: i32) -> (i32, i32) {
    %c0_i32 = arith.constant 0 : i32
    %c0_i32_0 = arith.constant 0 : i32
    %c0_i32_1 = arith.constant 0 : i32
    return %c0_i32, %c0_i32_0 : i32, i32
  }
  func.func @transform_10(%arg0: i32) -> (i32, i32, i32) {
    %c0_i32 = arith.constant 0 : i32
    %c0_i32_0 = arith.constant 0 : i32
    %c0_i32_1 = arith.constant 0 : i32
    return %arg0, %c0_i32, %c0_i32_0 : i32, i32, i32
  }
}

</mosaic_0001>

<llo_original>
// kernel: tpu_custom_call.1
$region0: #{tpu_custom_call.1}
  #allocation0 [shape = 'u32[]', space=smem, size = 0x4, offset = 0x4, fixed_abs, tag = 'smem constant byte address 0x4 - core index']
  #allocation1 [shape = 'u32[72,128]{1,0:T(1,128)}', space=vmem, size = 0x9000, scoped, tag = 'internal scratch']
  %s0 = inlined_call_operand.hbm [shape: bf16[2,16,64], index: 0, kind: input, shape index: {}]
  %s1 = inlined_call_operand.hbm [shape: bf16[3,64,128], index: 1, kind: input, shape index: {}]
  %s2 = inlined_call_operand.vmem [shape: f32[1,128], index: 2, kind: input, shape index: {}]
  %s3 = inlined_call_operand.vmem [shape: f32[1,128], index: 3, kind: input, shape index: {}]
  %s4 = inlined_call_operand.hbm [shape: bf16[3,128,128], index: 4, kind: input, shape index: {}]
  %s5 = inlined_call_operand.vmem [shape: f32[1,128], index: 5, kind: input, shape index: {}]
  %s6 = inlined_call_operand.vmem [shape: f32[1,128], index: 6, kind: input, shape index: {}]
  %s7 = inlined_call_operand.hbm [shape: bf16[64,128], index: 7, kind: input, shape index: {}]
  %s8 = inlined_call_operand.vmem [shape: f32[1,128], index: 8, kind: input, shape index: {}]
  %s9 = inlined_call_operand.vmem [shape: f32[1,128], index: 9, kind: input, shape index: {}]
  %s10 = inlined_call_operand.hbm [shape: f32[2,16,128], index: 10, kind: output, shape index: {}]
  %s11 = sld [smem:[#allocation0]]
  $region89: #{tpu_custom_call.1} parent=0
    _
  %s13 = ssub.s32 1, %s11
  %s14 = scalar_select 0, %s13, %s11
  $region1: #{tpu_custom_call.1} parent=0
    #allocation2 [shape = 'u8[8192]{0}', space=vmem, size = 0x2000, scoped, tag = 'input window, operand 0']
    #allocation3 [shape = 's32[2]{0}', space=sflag, size = 0x8, scoped, tag = 'scoped memory for tpu_custom_call.1']
    #allocation4 [shape = 's32[2]{0}', space=sflag, size = 0x8, scoped, tag = 'scoped memory for tpu_custom_call.1']
    #allocation5 [shape = 'u8[49152]{0}', space=vmem, size = 0xc000, scoped, tag = 'input window, operand 1, single buffered']
    #allocation6 [shape = 's32[1]{0}', space=sflag, size = 0x4, scoped, tag = 'scoped memory for tpu_custom_call.1']
    #allocation7 [shape = 'u8[98304]{0}', space=vmem, size = 0x18000, scoped, tag = 'input window, operand 4, single buffered']
    #allocation8 [shape = 'u8[16384]{0}', space=vmem, size = 0x4000, scoped, tag = 'input window, operand 7, single buffered']
    #allocation9 [shape = 's32[1]{0}', space=sflag, size = 0x4, scoped, tag = 'scoped memory for tpu_custom_call.1']
    #allocation10 [shape = 'u8[16384]{0}', space=vmem, size = 0x4000, scoped, tag = 'output window, operand 0']
    %15 = vsyncpa [#allocation3], 0
    %s16 = scalar_lea.sflag [#allocation3], 1
    %17 = vsyncpa %s16, 0
    %18 = vsyncpa [#allocation6], 0
    %19 = vsyncpa [#allocation9], 0
    %20 = vsyncpa [#allocation4], 0
    %s21 = scalar_lea.sflag [#allocation4], 1
    %22 = vsyncpa %s21, 0
    loop: start=0, step=1, limit=4
    $region2: #{tpu_custom_call.1} parent=1 // loop_pre_header
      _
    $region3: #{tpu_custom_call.1} parent=1 // loop_header
      %s24 = sphi 0, %s28
      %p25 = scmp.ge.s32.totalorder %s24, 4
      %s34 = sphi 0, %s36
      %s37 = sphi 0, %s34
      %s38 = sphi 0, %s37
      %s54 = sphi 0, %s38
      %s58 = sphi 0, %s58
      %s60 = sphi 0, %s58
      %s61 = sphi 0, %s60
      %s75 = sphi 0, %s61
      %s79 = sphi 0, %s79
      %s81 = sphi 0, %s79
      %s82 = sphi 0, %s81
      %s96 = sphi 0, %s82
      %s100 = sphi 0, %s100
      %s102 = sphi 0, %s100
      %s103 = sphi 0, %s102
      %s117 = sphi 0, %s103
      %s121 = sphi 0, %s121
      %s123 = sphi 0, %s121
      %s124 = sphi 0, %s123
      %s138 = sphi 0, %s124
      %s142 = sphi 0, %s142
      %s144 = sphi 0, %s142
      %s145 = sphi 0, %s144
      %s159 = sphi 0, %s145
      %s163 = sphi 0, %s163
      %s165 = sphi 0, %s163
      %s166 = sphi 0, %s165
      %s180 = sphi 0, %s166
      %s184 = sphi 0, %s184
      %s186 = sphi 0, %s184
      %s187 = sphi 0, %s186
      %s201 = sphi 0, %s187
      %s205 = sphi 0, %s205
      %s207 = sphi 0, %s205
      %s208 = sphi 0, %s207
      %s222 = sphi 0, %s208
      %s226 = sphi 0, %s226
      %s228 = sphi 0, %s226
      %s229 = sphi 0, %s228
      %s243 = sphi 0, %s229
      %s249 = sphi 0, %s251
      %s252 = sphi 0, %s249
      %s253 = sphi 0, %s252
      %s269 = sphi 0, %s253
    $region4: #{tpu_custom_call.1} parent=1 // loop_header_branch
      %27 = sbr.rel (%p25) target = $region8
    $region5: #{tpu_custom_call.1} parent=1 // loop_body
      %s29 = ssub.s32 %s24, 1
      %s30 = ssub.s32 %s24, 2
      %s31 = sadd.s32 %s24, 1
      %s32 = ssub.s32 %s24, %s31
      %p33 = scmp.eq.s32.totalorder %s32, 0
      %s35 = sadd.s32 %s34, 1
      %s36 = scalar_select %p33, %s34, %s35
      %p39 = pneg %p33
      %p40 = scmp.eq.s32.totalorder %s24, 1
      %p41 = por %p39, %p40
      %p42 = scmp.ne.s32.totalorder %s34, %s37
      %p43 = scmp.eq.s32.totalorder %s24, 0
      %p44 = por %p42, %p43
      %p45 = scmp.ne.s32.totalorder %s34, %s37
      %p46 = scmp.eq.s32.totalorder %s29, 1
      %p47 = por %p45, %p46
      %p48 = scmp.ne.s32.totalorder %s37, %s38
      %p49 = scmp.eq.s32.totalorder %s29, 0
      %p50 = por %p48, %p49
      %p51 = scmp.ne.s32.totalorder %s37, %s38
      %p52 = scmp.eq.s32.totalorder %s30, 1
      %p53 = por %p51, %p52
      %p55 = scmp.ne.s32.totalorder %s38, %s54
      %p56 = scmp.eq.s32.totalorder %s30, 0
      %p57 = por %p55, %p56
      %s59 = sadd.s32 %s58, 1
      %p62 = scmp.eq.s32.totalorder %s24, 1
      %p63 = scmp.ne.s32.totalorder %s58, %s60
      %p64 = scmp.eq.s32.totalorder %s24, 0
      %p65 = por %p63, %p64
      %p66 = scmp.ne.s32.totalorder %s58, %s60
      %p67 = scmp.eq.s32.totalorder %s29, 1
      %p68 = por %p66, %p67
      %p69 = scmp.ne.s32.totalorder %s60, %s61
      %p70 = scmp.eq.s32.totalorder %s29, 0
      %p71 = por %p69, %p70
      %p72 = scmp.ne.s32.totalorder %s60, %s61
      %p73 = scmp.eq.s32.totalorder %s30, 1
      %p74 = por %p72, %p73
      %p76 = scmp.ne.s32.totalorder %s61, %s75
      %p77 = scmp.eq.s32.totalorder %s30, 0
      %p78 = por %p76, %p77
      %s80 = sadd.s32 %s79, 1
      %p83 = scmp.eq.s32.totalorder %s24, 1
      %p84 = scmp.ne.s32.totalorder %s79, %s81
      %p85 = scmp.eq.s32.totalorder %s24, 0
      %p86 = por %p84, %p85
      %p87 = scmp.ne.s32.totalorder %s79, %s81
      %p88 = scmp.eq.s32.totalorder %s29, 1
      %p89 = por %p87, %p88
      %p90 = scmp.ne.s32.totalorder %s81, %s82
      %p91 = scmp.eq.s32.totalorder %s29, 0
      %p92 = por %p90, %p91
      %p93 = scmp.ne.s32.totalorder %s81, %s82
      %p94 = scmp.eq.s32.totalorder %s30, 1
      %p95 = por %p93, %p94
      %p97 = scmp.ne.s32.totalorder %s82, %s96
      %p98 = scmp.eq.s32.totalorder %s30, 0
      %p99 = por %p97, %p98
      %s101 = sadd.s32 %s100, 1
      %p104 = scmp.eq.s32.totalorder %s24, 1
      %p105 = scmp.ne.s32.totalorder %s100, %s102
      %p106 = scmp.eq.s32.totalorder %s24, 0
      %p107 = por %p105, %p106
      %p108 = scmp.ne.s32.totalorder %s100, %s102
      %p109 = scmp.eq.s32.totalorder %s29, 1
      %p110 = por %p108, %p109
      %p111 = scmp.ne.s32.totalorder %s102, %s103
      %p112 = scmp.eq.s32.totalorder %s29, 0
      %p113 = por %p111, %p112
      %p114 = scmp.ne.s32.totalorder %s102, %s103
      %p115 = scmp.eq.s32.totalorder %s30, 1
      %p116 = por %p114, %p115
      %p118 = scmp.ne.s32.totalorder %s103, %s117
      %p119 = scmp.eq.s32.totalorder %s30, 0
      %p120 = por %p118, %p119
      %s122 = sadd.s32 %s121, 1
      %p125 = scmp.eq.s32.totalorder %s24, 1
      %p126 = scmp.ne.s32.totalorder %s121, %s123
      %p127 = scmp.eq.s32.totalorder %s24, 0
      %p128 = por %p126, %p127
      %p129 = scmp.ne.s32.totalorder %s121, %s123
      %p130 = scmp.eq.s32.totalorder %s29, 1
      %p131 = por %p129, %p130
      %p132 = scmp.ne.s32.totalorder %s123, %s124
      %p133 = scmp.eq.s32.totalorder %s29, 0
      %p134 = por %p132, %p133
      %p135 = scmp.ne.s32.totalorder %s123, %s124
      %p136 = scmp.eq.s32.totalorder %s30, 1
      %p137 = por %p135, %p136
      %p139 = scmp.ne.s32.totalorder %s124, %s138
      %p140 = scmp.eq.s32.totalorder %s30, 0
      %p141 = por %p139, %p140
      %s143 = sadd.s32 %s142, 1
      %p146 = scmp.eq.s32.totalorder %s24, 1
      %p147 = scmp.ne.s32.totalorder %s142, %s144
      %p148 = scmp.eq.s32.totalorder %s24, 0
      %p149 = por %p147, %p148
      %p150 = scmp.ne.s32.totalorder %s142, %s144
      %p151 = scmp.eq.s32.totalorder %s29, 1
      %p152 = por %p150, %p151
      %p153 = scmp.ne.s32.totalorder %s144, %s145
      %p154 = scmp.eq.s32.totalorder %s29, 0
      %p155 = por %p153, %p154
      %p156 = scmp.ne.s32.totalorder %s144, %s145
      %p157 = scmp.eq.s32.totalorder %s30, 1
      %p158 = por %p156, %p157
      %p160 = scmp.ne.s32.totalorder %s145, %s159
      %p161 = scmp.eq.s32.totalorder %s30, 0
      %p162 = por %p160, %p161
      %s164 = sadd.s32 %s163, 1
      %p167 = scmp.eq.s32.totalorder %s24, 1
      %p168 = scmp.ne.s32.totalorder %s163, %s165
      %p169 = scmp.eq.s32.totalorder %s24, 0
      %p170 = por %p168, %p169
      %p171 = scmp.ne.s32.totalorder %s163, %s165
      %p172 = scmp.eq.s32.totalorder %s29, 1
      %p173 = por %p171, %p172
      %p174 = scmp.ne.s32.totalorder %s165, %s166
      %p175 = scmp.eq.s32.totalorder %s29, 0
      %p176 = por %p174, %p175
      %p177 = scmp.ne.s32.totalorder %s165, %s166
      %p178 = scmp.eq.s32.totalorder %s30, 1
      %p179 = por %p177, %p178
      %p181 = scmp.ne.s32.totalorder %s166, %s180
      %p182 = scmp.eq.s32.totalorder %s30, 0
      %p183 = por %p181, %p182
      %s185 = sadd.s32 %s184, 1
      %p188 = scmp.eq.s32.totalorder %s24, 1
      %p189 = scmp.ne.s32.totalorder %s184, %s186
      %p190 = scmp.eq.s32.totalorder %s24, 0
      %p191 = por %p189, %p190
      %p192 = scmp.ne.s32.totalorder %s184, %s186
      %p193 = scmp.eq.s32.totalorder %s29, 1
      %p194 = por %p192, %p193
      %p195 = scmp.ne.s32.totalorder %s186, %s187
      %p196 = scmp.eq.s32.totalorder %s29, 0
      %p197 = por %p195, %p196
      %p198 = scmp.ne.s32.totalorder %s186, %s187
      %p199 = scmp.eq.s32.totalorder %s30, 1
      %p200 = por %p198, %p199
      %p202 = scmp.ne.s32.totalorder %s187, %s201
      %p203 = scmp.eq.s32.totalorder %s30, 0
      %p204 = por %p202, %p203
      %s206 = sadd.s32 %s205, 1
      %p209 = scmp.eq.s32.totalorder %s24, 1
      %p210 = scmp.ne.s32.totalorder %s205, %s207
      %p211 = scmp.eq.s32.totalorder %s24, 0
      %p212 = por %p210, %p211
      %p213 = scmp.ne.s32.totalorder %s205, %s207
      %p214 = scmp.eq.s32.totalorder %s29, 1
      %p215 = por %p213, %p214
      %p216 = scmp.ne.s32.totalorder %s207, %s208
      %p217 = scmp.eq.s32.totalorder %s29, 0
      %p218 = por %p216, %p217
      %p219 = scmp.ne.s32.totalorder %s207, %s208
      %p220 = scmp.eq.s32.totalorder %s30, 1
      %p221 = por %p219, %p220
      %p223 = scmp.ne.s32.totalorder %s208, %s222
      %p224 = scmp.eq.s32.totalorder %s30, 0
      %p225 = por %p223, %p224
      %s227 = sadd.s32 %s226, 1
      %p230 = scmp.eq.s32.totalorder %s24, 1
      %p231 = scmp.ne.s32.totalorder %s226, %s228
      %p232 = scmp.eq.s32.totalorder %s24, 0
      %p233 = por %p231, %p232
      %p234 = scmp.ne.s32.totalorder %s226, %s228
      %p235 = scmp.eq.s32.totalorder %s29, 1
      %p236 = por %p234, %p235
      %p237 = scmp.ne.s32.totalorder %s228, %s229
      %p238 = scmp.eq.s32.totalorder %s29, 0
      %p239 = por %p237, %p238
      %p240 = scmp.ne.s32.totalorder %s228, %s229
      %p241 = scmp.eq.s32.totalorder %s30, 1
      %p242 = por %p240, %p241
      %p244 = scmp.ne.s32.totalorder %s229, %s243
      %p245 = scmp.eq.s32.totalorder %s30, 0
      %p246 = por %p244, %p245
      %s247 = ssub.s32 %s24, %s31
      %p248 = scmp.eq.s32.totalorder %s247, 0
      %s250 = sadd.s32 %s249, 1
      %s251 = scalar_select %p248, %s249, %s250
      %p254 = pneg %p248
      %p255 = scmp.eq.s32.totalorder %s24, 1
      %p256 = por %p254, %p255
      %p257 = scmp.ne.s32.totalorder %s249, %s252
      %p258 = scmp.eq.s32.totalorder %s24, 0
      %p259 = por %p257, %p258
      %p260 = scmp.ne.s32.totalorder %s249, %s252
      %p261 = scmp.eq.s32.totalorder %s29, 1
      %p262 = por %p260, %p261
      %p263 = scmp.ne.s32.totalorder %s252, %s253
      %p264 = scmp.eq.s32.totalorder %s29, 0
      %p265 = por %p263, %p264
      %p266 = scmp.ne.s32.totalorder %s252, %s253
      %p267 = scmp.eq.s32.totalorder %s30, 1
      %p268 = por %p266, %p267
      %p270 = scmp.ne.s32.totalorder %s253, %s269
      %p271 = scmp.eq.s32.totalorder %s30, 0
      %p272 = por %p270, %p271
      %p273 = scmp.le.s32.totalorder 1, %s24
      %p274 = scmp.lt.s32.totalorder %s24, 3
      %p275 = pnand %p273, %p274
      %p276 = pneg %p275
      // Predicated region
      $region9: #{tpu_custom_call.1} parent=5 // pred_check
        _
      $region10: #{tpu_custom_call.1} parent=5 // pred_check_branch
        %278 = sbr.rel (%p275) target = $region12
      $region11: #{tpu_custom_call.1} parent=5 // pred_region
        %s279 = ssub.s32 %s24, 1
        // Predicated region
        $region13: #{tpu_custom_call.1} parent=11 // pred_check
          %p280 = pneg %p71
        $region14: #{tpu_custom_call.1} parent=11 // pred_check_branch
          %282 = sbr.rel (%p280) target = $region16
        $region15: #{tpu_custom_call.1} parent=11 // pred_region
          %284 = vsyncadd [#allocation6], 0
          %s285 = sshll.u32 %s1, 4
          %s286 = int_to_ptr.hbm [resolvable:$true] %s285
          %s287 = sshll.u32 [#allocation5], 4
          %s288 = int_to_ptr.vmem [resolvable:$true] %s287
          %293 = dma.hbm_to_vmem [thread:$0]  %s286, 1536, %s288, [#allocation6], 64, 64, 4
        $region16: #{tpu_custom_call.1} parent=11 // pred_fallthru
          _
        // Predicated region
        $region17: #{tpu_custom_call.1} parent=11 // pred_check
          %p294 = pneg %p92
        $region18: #{tpu_custom_call.1} parent=11 // pred_check_branch
          %296 = sbr.rel (%p294) target = $region20
        $region19: #{tpu_custom_call.1} parent=11 // pred_region
          _
        $region20: #{tpu_custom_call.1} parent=11 // pred_fallthru
          _
        // Predicated region
        $region21: #{tpu_custom_call.1} parent=11 // pred_check
          %p297 = pneg %p113
        $region22: #{tpu_custom_call.1} parent=11 // pred_check_branch
          %299 = sbr.rel (%p297) target = $region24
        $region23: #{tpu_custom_call.1} parent=11 // pred_region
          _
        $region24: #{tpu_custom_call.1} parent=11 // pred_fallthru
          _
        // Predicated region
        $region25: #{tpu_custom_call.1} parent=11 // pred_check
          %p300 = pneg %p134
        $region26: #{tpu_custom_call.1} parent=11 // pred_check_branch
          %302 = sbr.rel (%p300) target = $region28
        $region27: #{tpu_custom_call.1} parent=11 // pred_region
          %304 = vsyncadd [#allocation6], 0
          %s305 = sshll.u32 %s4, 4
          %s306 = int_to_ptr.hbm [resolvable:$true] %s305
          %s307 = sshll.u32 [#allocation7], 4
          %s308 = int_to_ptr.vmem [resolvable:$true] %s307
          %313 = dma.hbm_to_vmem [thread:$0]  %s306, 3072, %s308, [#allocation6], 64, 64, 4
        $region28: #{tpu_custom_call.1} parent=11 // pred_fallthru
          _
        // Predicated region
        $region29: #{tpu_custom_call.1} parent=11 // pred_check
          %p314 = pneg %p155
        $region30: #{tpu_custom_call.1} parent=11 // pred_check_branch
          %316 = sbr.rel (%p314) target = $region32
        $region31: #{tpu_custom_call.1} parent=11 // pred_region
          _
        $region32: #{tpu_custom_call.1} parent=11 // pred_fallthru
          _
        // Predicated region
        $region33: #{tpu_custom_call.1} parent=11 // pred_check
          %p317 = pneg %p176
        $region34: #{tpu_custom_call.1} parent=11 // pred_check_branch
          %319 = sbr.rel (%p317) target = $region36
        $region35: #{tpu_custom_call.1} parent=11 // pred_region
          _
        $region36: #{tpu_custom_call.1} parent=11 // pred_fallthru
          _
        // Predicated region
        $region37: #{tpu_custom_call.1} parent=11 // pred_check
          %p320 = pneg %p197
        $region38: #{tpu_custom_call.1} parent=11 // pred_check_branch
          %322 = sbr.rel (%p320) target = $region40
        $region39: #{tpu_custom_call.1} parent=11 // pred_region
          %324 = vsyncadd [#allocation9], 0
          %s325 = sshll.u32 %s7, 4
          %s326 = int_to_ptr.hbm [resolvable:$true] %s325
          %s327 = sshll.u32 [#allocation8], 4
          %s328 = int_to_ptr.vmem [resolvable:$true] %s327
          %333 = dma.hbm_to_vmem [thread:$0]  %s326, 512, %s328, [#allocation9], 64, 64, 4
        $region40: #{tpu_custom_call.1} parent=11 // pred_fallthru
          _
        // Predicated region
        $region41: #{tpu_custom_call.1} parent=11 // pred_check
          %p334 = pneg %p218
        $region42: #{tpu_custom_call.1} parent=11 // pred_check_branch
          %336 = sbr.rel (%p334) target = $region44
        $region43: #{tpu_custom_call.1} parent=11 // pred_region
          _
        $region44: #{tpu_custom_call.1} parent=11 // pred_fallthru
          _
        // Predicated region
        $region45: #{tpu_custom_call.1} parent=11 // pred_check
          %p337 = pneg %p239
        $region46: #{tpu_custom_call.1} parent=11 // pred_check_branch
          %339 = sbr.rel (%p337) target = $region48
        $region47: #{tpu_custom_call.1} parent=11 // pred_region
          _
        $region48: #{tpu_custom_call.1} parent=11 // pred_fallthru
          _
      $region12: #{tpu_custom_call.1} parent=5 // pred_fallthru
        _
      %p340 = scmp.lt.s32.totalorder %s24, 2
      // Predicated region
      $region49: #{tpu_custom_call.1} parent=5 // pred_check
        %p341 = pneg %p340
      $region50: #{tpu_custom_call.1} parent=5 // pred_check_branch
        %343 = sbr.rel (%p341) target = $region52
      $region51: #{tpu_custom_call.1} parent=5 // pred_region
        // Predicated region
        $region53: #{tpu_custom_call.1} parent=51 // pred_check
          %p344 = pneg %p44
        $region54: #{tpu_custom_call.1} parent=51 // pred_check_branch
          %346 = sbr.rel (%p344) target = $region56
        $region55: #{tpu_custom_call.1} parent=51 // pred_region
          %s347 = sand.u32 %s34, 1
          %s348 = scalar_lea.sflag [#allocation3], %s347
          %s349 = sand.u32 %s34, 1
          %s350 = smul.addr %s349, 8
          %s351 = scalar_lea.vmem [#allocation2], %s350
          %353 = vsyncadd %s348, 0
          %s354 = smul.addr %s24, 2
          %s355 = smul.addr %s354, 4
          %s356 = scalar_lea.hbm %s0, %s355
          %s357 = sshll.u32 %s356, 4
          %s358 = int_to_ptr.hbm [resolvable:$true] %s357
          %s359 = sshll.u32 %s351, 4
          %s360 = int_to_ptr.vmem [resolvable:$true] %s359
          %365 = dma.hbm_to_vmem [thread:$0]  %s358, 128, %s360, %s348, 64, 64, 4
        $region56: #{tpu_custom_call.1} parent=51 // pred_fallthru
          _
      $region52: #{tpu_custom_call.1} parent=5 // pred_fallthru
        _
      %p366 = scmp.le.s32.totalorder 1, %s24
      %p367 = scmp.lt.s32.totalorder %s24, 3
      %p368 = pnand %p366, %p367
      %p369 = pneg %p368
      // Predicated region
      $region57: #{tpu_custom_call.1} parent=5 // pred_check
        _
      $region58: #{tpu_custom_call.1} parent=5 // pred_check_branch
        %371 = sbr.rel (%p368) target = $region60
      $region59: #{tpu_custom_call.1} parent=5 // pred_region
        %s372 = ssub.s32 %s24, 1
        %s373 = sand.u32 %s37, 1
        %s374 = scalar_lea.sflag [#allocation3], %s373
        %s375 = sand.u32 %s37, 1
        %s376 = smul.addr %s375, 8
        %s377 = scalar_lea.vmem [#allocation2], %s376
        // Predicated region
        $region61: #{tpu_custom_call.1} parent=59 // pred_check
          %p378 = pneg %p50
        $region62: #{tpu_custom_call.1} parent=59 // pred_check_branch
          %380 = sbr.rel (%p378) target = $region64
        $region63: #{tpu_custom_call.1} parent=59 // pred_region
          %382 = dma.done %s374, 128
        $region64: #{tpu_custom_call.1} parent=59 // pred_fallthru
          _
        // Predicated region
        $region65: #{tpu_custom_call.1} parent=59 // pred_check
          %p383 = pneg %p71
        $region66: #{tpu_custom_call.1} parent=59 // pred_check_branch
          %385 = sbr.rel (%p383) target = $region68
        $region67: #{tpu_custom_call.1} parent=59 // pred_region
          %387 = dma.done [#allocation6], 1536
        $region68: #{tpu_custom_call.1} parent=59 // pred_fallthru
          _
        // Predicated region
        $region69: #{tpu_custom_call.1} parent=59 // pred_check
          %p388 = pneg %p134
        $region70: #{tpu_custom_call.1} parent=59 // pred_check_branch
          %390 = sbr.rel (%p388) target = $region72
        $region71: #{tpu_custom_call.1} parent=59 // pred_region
          %392 = dma.done [#allocation6], 3072
        $region72: #{tpu_custom_call.1} parent=59 // pred_fallthru
          _
        // Predicated region
        $region73: #{tpu_custom_call.1} parent=59 // pred_check
          %p393 = pneg %p197
        $region74: #{tpu_custom_call.1} parent=59 // pred_check_branch
          %395 = sbr.rel (%p393) target = $region76
        $region75: #{tpu_custom_call.1} parent=59 // pred_region
          %397 = dma.done [#allocation9], 512
        $region76: #{tpu_custom_call.1} parent=59 // pred_fallthru
          _
        %s398 = sand.u32 %s37, 1
        %s399 = scalar_lea.sflag [#allocation3], %s398
        %s400 = sand.u32 %s37, 1
        %s401 = smul.addr %s400, 8
        %s402 = scalar_lea.vmem [#allocation2], %s401
        %p403 = pneg %p50
        %p404 = pneg %p47
        %p405 = pneg %p71
        %p406 = pneg %p68
        %p407 = pneg %p92
        %p408 = pneg %p89
        %p409 = pneg %p113
        %p410 = pneg %p110
        %p411 = pneg %p134
        %p412 = pneg %p131
        %p413 = pneg %p155
        %p414 = pneg %p152
        %p415 = pneg %p176
        %p416 = pneg %p173
        %p417 = pneg %p197
        %p418 = pneg %p194
        %p419 = pneg %p218
        %p420 = pneg %p215
        %p421 = pneg %p239
        %p422 = pneg %p236
        %p423 = pneg %p265
        %p424 = pneg %p262
        %s425 = sand.u32 %s252, 1
        %s426 = scalar_lea.sflag [#allocation4], %s425
        %s427 = sand.u32 %s252, 1
        %s428 = smul.addr %s427, 16
        %s429 = scalar_lea.vmem [#allocation10], %s428
        %v431 = vlaneseq
        %v432 = vshrl.u32 %v431, 7
        %v433 = vadd.s32 %v432, 8
        %vm434 = vcmp.lt.s32.totalorder %v432, 0
        %v435 = vsub.s32 0, %v432
        %v436 = vsel %vm434, %v435, %v432
        %v437 = vshrl.u32 %v436, 4
        %v438 = vand.u32 %v436, 15
        %v439 = vsub.s32 0, %v438
        %v440 = vsel %vm434, %v439, %v438
        %vm441 = vcmp.lt.s32.totalorder %v433, 0
        %v442 = vsub.s32 0, %v433
        %v443 = vsel %vm441, %v442, %v433
        %v444 = vshrl.u32 %v443, 4
        %v445 = vand.u32 %v443, 15
        %v446 = vsub.s32 0, %v445
        %v447 = vsel %vm441, %v446, %v445
        %vm448 = vcmp.ne.s32.totalorder %v440, 0
        %vm449 = vcmp.ne.s32.totalorder %v447, 0
        %vm450 = vcmp.lt.s32.totalorder %v440, 0
        %vm451 = vcmp.lt.s32.totalorder %v447, 0
        %vm452 = vmand %vm450, %vm448
        %vm453 = vmand %vm451, %vm449
        %v454 = vadd.s32 %v440, 16
        %v455 = vadd.s32 %v447, 16
        %v456 = vsel %vm452, %v454, %v440
        %v457 = vsel %vm453, %v455, %v447
        %vm458 = vcmp.ne.s32.totalorder %v456, 0
        %vm459 = vcmp.ne.s32.totalorder %v457, 0
        %vm460 = vcmp.ne.s32.totalorder %v456, 15
        %vm461 = vcmp.ne.s32.totalorder %v457, 15
        %v462 = vsel %vm458, 1, 0
        %v463 = vsel %vm459, 1, 0
        %vm464 = vcmp.eq.s32.totalorder %v462, 1
        %vm465 = vcmp.eq.s32.totalorder %v463, 1
        %v466 = vsel %vm460, 1, 0
        %v467 = vsel %vm461, 1, 0
        %vm468 = vcmp.eq.s32.totalorder %v466, 1
        %vm469 = vcmp.eq.s32.totalorder %v467, 1
        %v470 = vld [vmem:[%s377] sm:$0xf]
        %v471 = vld [vmem:[%s377 + $0x4] sm:$0xf]
        %v472 = vunpack.c.l.bf16 %v470
        %v473 = vunpack.c.l.bf16 %v471
        %v474 = vrot.slane %v472, 7
        %v475 = vrot.slane %v473, 7
        %vm476 = vcmp.lt.s32.totalorder %v432, 1
        %v477 = vsel %vm476, %v474, %v475
        %v478 = vsel %vm476, %v475, %v474
        %v479 = vsel %vm464, %v478, 0.0
        %v480 = vsel %vm465, %v477, 0.0
        %v481 = vrot.slane %v472, 1
        %v482 = vrot.slane %v473, 1
        %vm483 = vcmp.lt.s32.totalorder %v432, 7
        %v484 = vsel %vm483, %v481, %v482
        %v485 = vsel %vm483, %v482, %v481
        %v486 = vsel %vm468, %v484, 0.0
        %v487 = vsel %vm469, %v485, 0.0
        %v488 = vpack.c.bf16 %v480, %v479
        %v489 = vld [vmem:[#allocation5] sm:$0xf]
        %v490 = vld [vmem:[#allocation5 + $0x4] sm:$0xf]
        %v491 = vld [vmem:[#allocation5 + $0x8] sm:$0xf]
        %v492 = vld [vmem:[#allocation5 + $0xc] sm:$0xf]
        %v493 = vld [vmem:[#allocation5 + $0x10] sm:$0xf]
        %v494 = vld [vmem:[#allocation5 + $0x14] sm:$0xf]
        %v495 = vld [vmem:[#allocation5 + $0x18] sm:$0xf]
        %v496 = vld [vmem:[#allocation5 + $0x1c] sm:$0xf]
        %s497 = scalar_lea.vmem [#allocation5], 32
        %v498 = vld [vmem:[%s497] sm:$0xf]
        %v499 = vld [vmem:[%s497 + $0x4] sm:$0xf]
        %v500 = vld [vmem:[%s497 + $0x8] sm:$0xf]
        %v501 = vld [vmem:[%s497 + $0xc] sm:$0xf]
        %v502 = vld [vmem:[%s497 + $0x10] sm:$0xf]
        %v503 = vld [vmem:[%s497 + $0x14] sm:$0xf]
        %v504 = vld [vmem:[%s497 + $0x18] sm:$0xf]
        %v505 = vld [vmem:[%s497 + $0x1c] sm:$0xf]
        %v508 = vunpack.c.l.b16 %v470
        %v509 = vunpack.c.l.b16 %v471
        %v510 = vpack.c.b16 %v509, %v508
        %v519 = vunpack.c.l.b16 %v498
        %v520 = vunpack.c.l.b16 %v499
        %v521 = vunpack.c.l.b16 %v500
        %v522 = vunpack.c.l.b16 %v501
        %v523 = vunpack.c.l.b16 %v502
        %v524 = vunpack.c.l.b16 %v503
        %v525 = vunpack.c.l.b16 %v504
        %v526 = vunpack.c.l.b16 %v505
        %v527 = vpack.c.b16 %v520, %v519
        %v528 = vpack.c.b16 %v522, %v521
        %v529 = vpack.c.b16 %v524, %v523
        %v530 = vpack.c.b16 %v526, %v525
        %vm535 = vcmask 523264
        %v537 = vsel %vm535, %v510, 0
        %539 = vmatpush.bf16.msra.mxu0 0
        %540 = vmatpush.bf16.msra.mxu0 0
        %541 = vmatpush.bf16.msra.mxu0 0
        %542 = vmatpush.bf16.msra.mxu0 0
        %543 = vmatpush.bf16.msra.mxu0 %v530
        %544 = vmatpush.bf16.msra.mxu0 %v529
        %545 = vmatpush.bf16.msra.mxu0 %v528
        %546 = vmatpush.bf16.msra.mxu0 %v527
        %547 = vmatmul.bf16.gmra.mxu0 %v537
        %v548 = vpop.f32.mrf.mxu0
        %v549 = vadd.f32 0.0, %v548
        %v550 = vpop.f32.mrf.mxu0
        %v551 = vadd.f32 0.0, %v550
        %552 = vdwg.mxu0
        %v561 = vunpack.c.l.b16 %v489
        %v562 = vunpack.c.l.b16 %v490
        %v563 = vunpack.c.l.b16 %v491
        %v564 = vunpack.c.l.b16 %v492
        %v565 = vunpack.c.l.b16 %v493
        %v566 = vunpack.c.l.b16 %v494
        %v567 = vunpack.c.l.b16 %v495
        %v568 = vunpack.c.l.b16 %v496
        %v569 = vpack.c.b16 %v562, %v561
        %v570 = vpack.c.b16 %v564, %v563
        %v571 = vpack.c.b16 %v566, %v565
        %v572 = vpack.c.b16 %v568, %v567
        %v578 = vsel %vm535, %v488, 0
        %580 = vmatpush.bf16.msra.mxu0 0
        %581 = vmatpush.bf16.msra.mxu0 0
        %582 = vmatpush.bf16.msra.mxu0 0
        %583 = vmatpush.bf16.msra.mxu0 0
        %584 = vmatpush.bf16.msra.mxu0 %v572
        %585 = vmatpush.bf16.msra.mxu0 %v571
        %586 = vmatpush.bf16.msra.mxu0 %v570
        %587 = vmatpush.bf16.msra.mxu0 %v569
        %588 = vmatmul.bf16.gmra.mxu0 %v578
        %v589 = vpop.f32.mrf.mxu0
        %v590 = vadd.f32 %v549, %v589
        %v591 = vpop.f32.mrf.mxu0
        %v592 = vadd.f32 %v551, %v591
        %593 = vdwg.mxu0
        %v594 = vpack.c.bf16 %v487, %v486
        %s595 = scalar_lea.vmem [#allocation5], 64
        %v596 = vld [vmem:[%s595] sm:$0xf]
        %v597 = vld [vmem:[%s595 + $0x4] sm:$0xf]
        %v598 = vld [vmem:[%s595 + $0x8] sm:$0xf]
        %v599 = vld [vmem:[%s595 + $0xc] sm:$0xf]
        %v600 = vld [vmem:[%s595 + $0x10] sm:$0xf]
        %v601 = vld [vmem:[%s595 + $0x14] sm:$0xf]
        %v602 = vld [vmem:[%s595 + $0x18] sm:$0xf]
        %v603 = vld [vmem:[%s595 + $0x1c] sm:$0xf]
        %v612 = vunpack.c.l.b16 %v596
        %v613 = vunpack.c.l.b16 %v597
        %v614 = vunpack.c.l.b16 %v598
        %v615 = vunpack.c.l.b16 %v599
        %v616 = vunpack.c.l.b16 %v600
        %v617 = vunpack.c.l.b16 %v601
        %v618 = vunpack.c.l.b16 %v602
        %v619 = vunpack.c.l.b16 %v603
        %v620 = vpack.c.b16 %v613, %v612
        %v621 = vpack.c.b16 %v615, %v614
        %v622 = vpack.c.b16 %v617, %v616
        %v623 = vpack.c.b16 %v619, %v618
        %v629 = vsel %vm535, %v594, 0
        %631 = vmatpush.bf16.msra.mxu0 0
        %632 = vmatpush.bf16.msra.mxu0 0
        %633 = vmatpush.bf16.msra.mxu0 0
        %634 = vmatpush.bf16.msra.mxu0 0
        %635 = vmatpush.bf16.msra.mxu0 %v623
        %636 = vmatpush.bf16.msra.mxu0 %v622
        %637 = vmatpush.bf16.msra.mxu0 %v621
        %638 = vmatpush.bf16.msra.mxu0 %v620
        %639 = vmatmul.bf16.gmra.mxu0 %v629
        %v640 = vpop.f32.mrf.mxu0
        %v641 = vadd.f32 0.0, %v640
        %v642 = vpop.f32.mrf.mxu0
        %v643 = vadd.f32 0.0, %v642
        %644 = vdwg.mxu0
        %v645 = vadd.f32 %v590, %v641
        %v646 = vadd.f32 %v592, %v643
        %v647 = vld [vmem:[%s2] sm:$0x1]
        %v649 = vperm.slane %v647, 0
        %v651 = vmul.f32 %v645, %v649
        %v652 = vmul.f32 %v646, %v649
        %v653 = vld [vmem:[%s3] sm:$0x1]
        %v655 = vperm.slane %v653, 0
        %v657 = vadd.f32 %v651, %v655
        %v658 = vadd.f32 %v652, %v655
        %v659 = vmax.f32 %v657, 0.0
        %v660 = vmax.f32 %v658, 0.0
        %v661 = vrot.slane %v659, 7
        %v662 = vrot.slane %v660, 7
        %v663 = vsel %vm476, %v661, %v662
        %v664 = vsel %vm476, %v662, %v661
        %v665 = vsel %vm464, %v664, 0.0
        %v666 = vsel %vm465, %v663, 0.0
        %v667 = vrot.slane %v659, 1
        %v668 = vrot.slane %v660, 1
        %v669 = vsel %vm483, %v667, %v668
        %v670 = vsel %vm483, %v668, %v667
        %v671 = vsel %vm468, %v669, 0.0
        %v672 = vsel %vm469, %v670, 0.0
        %v673 = vpack.c.bf16 %v666, %v665
        %v674 = vld [vmem:[#allocation7] sm:$0xf]
        %v675 = vld [vmem:[#allocation7 + $0x4] sm:$0xf]
        %v676 = vld [vmem:[#allocation7 + $0x8] sm:$0xf]
        %v677 = vld [vmem:[#allocation7 + $0xc] sm:$0xf]
        %v678 = vld [vmem:[#allocation7 + $0x10] sm:$0xf]
        %v679 = vld [vmem:[#allocation7 + $0x14] sm:$0xf]
        %v680 = vld [vmem:[#allocation7 + $0x18] sm:$0xf]
        %v681 = vld [vmem:[#allocation7 + $0x1c] sm:$0xf]
        %v682 = vld [vmem:[#allocation7 + $0x20] sm:$0xf]
        %v683 = vld [vmem:[#allocation7 + $0x24] sm:$0xf]
        %v684 = vld [vmem:[#allocation7 + $0x28] sm:$0xf]
        %v685 = vld [vmem:[#allocation7 + $0x2c] sm:$0xf]
        %v686 = vld [vmem:[#allocation7 + $0x30] sm:$0xf]
        %v687 = vld [vmem:[#allocation7 + $0x34] sm:$0xf]
        %v688 = vld [vmem:[#allocation7 + $0x38] sm:$0xf]
        %v689 = vld [vmem:[#allocation7 + $0x3c] sm:$0xf]
        %v690 = vpack.c.bf16 %v660, %v659
        %s691 = scalar_lea.vmem [#allocation7], 64
        %v692 = vld [vmem:[%s691] sm:$0xf]
        %v693 = vld [vmem:[%s691 + $0x4] sm:$0xf]
        %v694 = vld [vmem:[%s691 + $0x8] sm:$0xf]
        %v695 = vld [vmem:[%s691 + $0xc] sm:$0xf]
        %v696 = vld [vmem:[%s691 + $0x10] sm:$0xf]
        %v697 = vld [vmem:[%s691 + $0x14] sm:$0xf]
        %v698 = vld [vmem:[%s691 + $0x18] sm:$0xf]
        %v699 = vld [vmem:[%s691 + $0x1c] sm:$0xf]
        %v700 = vld [vmem:[%s691 + $0x20] sm:$0xf]
        %v701 = vld [vmem:[%s691 + $0x24] sm:$0xf]
        %v702 = vld [vmem:[%s691 + $0x28] sm:$0xf]
        %v703 = vld [vmem:[%s691 + $0x2c] sm:$0xf]
        %v704 = vld [vmem:[%s691 + $0x30] sm:$0xf]
        %v705 = vld [vmem:[%s691 + $0x34] sm:$0xf]
        %v706 = vld [vmem:[%s691 + $0x38] sm:$0xf]
        %v707 = vld [vmem:[%s691 + $0x3c] sm:$0xf]
        %v724 = vunpack.c.l.b16 %v692
        %v725 = vunpack.c.l.b16 %v693
        %v726 = vunpack.c.l.b16 %v694
        %v727 = vunpack.c.l.b16 %v695
        %v728 = vunpack.c.l.b16 %v696
        %v729 = vunpack.c.l.b16 %v697
        %v730 = vunpack.c.l.b16 %v698
        %v731 = vunpack.c.l.b16 %v699
        %v732 = vunpack.c.l.b16 %v700
        %v733 = vunpack.c.l.b16 %v701
        %v734 = vunpack.c.l.b16 %v702
        %v735 = vunpack.c.l.b16 %v703
        %v736 = vunpack.c.l.b16 %v704
        %v737 = vunpack.c.l.b16 %v705
        %v738 = vunpack.c.l.b16 %v706
        %v739 = vunpack.c.l.b16 %v707
        %v740 = vpack.c.b16 %v725, %v724
        %v741 = vpack.c.b16 %v727, %v726
        %v742 = vpack.c.b16 %v729, %v728
        %v743 = vpack.c.b16 %v731, %v730
        %v744 = vpack.c.b16 %v733, %v732
        %v745 = vpack.c.b16 %v735, %v734
        %v746 = vpack.c.b16 %v737, %v736
        %v747 = vpack.c.b16 %v739, %v738
        %756 = vmatpush.bf16.msra.mxu0 %v747
        %757 = vmatpush.bf16.msra.mxu0 %v746
        %758 = vmatpush.bf16.msra.mxu0 %v745
        %759 = vmatpush.bf16.msra.mxu0 %v744
        %760 = vmatpush.bf16.msra.mxu0 %v743
        %761 = vmatpush.bf16.msra.mxu0 %v742
        %762 = vmatpush.bf16.msra.mxu0 %v741
        %763 = vmatpush.bf16.msra.mxu0 %v740
        %764 = vmatmul.bf16.gmra.mxu0 %v690
        %v765 = vpop.f32.mrf.mxu0
        %v766 = vadd.f32 0.0, %v765
        %v767 = vpop.f32.mrf.mxu0
        %v768 = vadd.f32 0.0, %v767
        %769 = vdwg.mxu0
        %v786 = vunpack.c.l.b16 %v674
        %v787 = vunpack.c.l.b16 %v675
        %v788 = vunpack.c.l.b16 %v676
        %v789 = vunpack.c.l.b16 %v677
        %v790 = vunpack.c.l.b16 %v678
        %v791 = vunpack.c.l.b16 %v679
        %v792 = vunpack.c.l.b16 %v680
        %v793 = vunpack.c.l.b16 %v681
        %v794 = vunpack.c.l.b16 %v682
        %v795 = vunpack.c.l.b16 %v683
        %v796 = vunpack.c.l.b16 %v684
        %v797 = vunpack.c.l.b16 %v685
        %v798 = vunpack.c.l.b16 %v686
        %v799 = vunpack.c.l.b16 %v687
        %v800 = vunpack.c.l.b16 %v688
        %v801 = vunpack.c.l.b16 %v689
        %v802 = vpack.c.b16 %v787, %v786
        %v803 = vpack.c.b16 %v789, %v788
        %v804 = vpack.c.b16 %v791, %v790
        %v805 = vpack.c.b16 %v793, %v792
        %v806 = vpack.c.b16 %v795, %v794
        %v807 = vpack.c.b16 %v797, %v796
        %v808 = vpack.c.b16 %v799, %v798
        %v809 = vpack.c.b16 %v801, %v800
        %818 = vmatpush.bf16.msra.mxu0 %v809
        %819 = vmatpush.bf16.msra.mxu0 %v808
        %820 = vmatpush.bf16.msra.mxu0 %v807
        %821 = vmatpush.bf16.msra.mxu0 %v806
        %822 = vmatpush.bf16.msra.mxu0 %v805
        %823 = vmatpush.bf16.msra.mxu0 %v804
        %824 = vmatpush.bf16.msra.mxu0 %v803
        %825 = vmatpush.bf16.msra.mxu0 %v802
        %826 = vmatmul.bf16.gmra.mxu0 %v673
        %v827 = vpop.f32.mrf.mxu0
        %v828 = vadd.f32 %v766, %v827
        %v829 = vpop.f32.mrf.mxu0
        %v830 = vadd.f32 %v768, %v829
        %831 = vdwg.mxu0
        %v832 = vpack.c.bf16 %v672, %v671
        %s833 = scalar_lea.vmem [#allocation7], 128
        %v834 = vld [vmem:[%s833] sm:$0xf]
        %v835 = vld [vmem:[%s833 + $0x4] sm:$0xf]
        %v836 = vld [vmem:[%s833 + $0x8] sm:$0xf]
        %v837 = vld [vmem:[%s833 + $0xc] sm:$0xf]
        %v838 = vld [vmem:[%s833 + $0x10] sm:$0xf]
        %v839 = vld [vmem:[%s833 + $0x14] sm:$0xf]
        %v840 = vld [vmem:[%s833 + $0x18] sm:$0xf]
        %v841 = vld [vmem:[%s833 + $0x1c] sm:$0xf]
        %v842 = vld [vmem:[%s833 + $0x20] sm:$0xf]
        %v843 = vld [vmem:[%s833 + $0x24] sm:$0xf]
        %v844 = vld [vmem:[%s833 + $0x28] sm:$0xf]
        %v845 = vld [vmem:[%s833 + $0x2c] sm:$0xf]
        %v846 = vld [vmem:[%s833 + $0x30] sm:$0xf]
        %v847 = vld [vmem:[%s833 + $0x34] sm:$0xf]
        %v848 = vld [vmem:[%s833 + $0x38] sm:$0xf]
        %v849 = vld [vmem:[%s833 + $0x3c] sm:$0xf]
        %v866 = vunpack.c.l.b16 %v834
        %v867 = vunpack.c.l.b16 %v835
        %v868 = vunpack.c.l.b16 %v836
        %v869 = vunpack.c.l.b16 %v837
        %v870 = vunpack.c.l.b16 %v838
        %v871 = vunpack.c.l.b16 %v839
        %v872 = vunpack.c.l.b16 %v840
        %v873 = vunpack.c.l.b16 %v841
        %v874 = vunpack.c.l.b16 %v842
        %v875 = vunpack.c.l.b16 %v843
        %v876 = vunpack.c.l.b16 %v844
        %v877 = vunpack.c.l.b16 %v845
        %v878 = vunpack.c.l.b16 %v846
        %v879 = vunpack.c.l.b16 %v847
        %v880 = vunpack.c.l.b16 %v848
        %v881 = vunpack.c.l.b16 %v849
        %v882 = vpack.c.b16 %v867, %v866
        %v883 = vpack.c.b16 %v869, %v868
        %v884 = vpack.c.b16 %v871, %v870
        %v885 = vpack.c.b16 %v873, %v872
        %v886 = vpack.c.b16 %v875, %v874
        %v887 = vpack.c.b16 %v877, %v876
        %v888 = vpack.c.b16 %v879, %v878
        %v889 = vpack.c.b16 %v881, %v880
        %898 = vmatpush.bf16.msra.mxu0 %v889
        %899 = vmatpush.bf16.msra.mxu0 %v888
        %900 = vmatpush.bf16.msra.mxu0 %v887
        %901 = vmatpush.bf16.msra.mxu0 %v886
        %902 = vmatpush.bf16.msra.mxu0 %v885
        %903 = vmatpush.bf16.msra.mxu0 %v884
        %904 = vmatpush.bf16.msra.mxu0 %v883
        %905 = vmatpush.bf16.msra.mxu0 %v882
        %906 = vmatmul.bf16.gmra.mxu0 %v832
        %v907 = vpop.f32.mrf.mxu0
        %v908 = vadd.f32 0.0, %v907
        %v909 = vpop.f32.mrf.mxu0
        %v910 = vadd.f32 0.0, %v909
        %911 = vdwg.mxu0
        %v912 = vadd.f32 %v828, %v908
        %v913 = vadd.f32 %v830, %v910
        %v914 = vld [vmem:[%s5] sm:$0x1]
        %v916 = vperm.slane %v914, 0
        %v918 = vmul.f32 %v912, %v916
        %v919 = vmul.f32 %v913, %v916
        %v920 = vld [vmem:[%s6] sm:$0x1]
        %v922 = vperm.slane %v920, 0
        %v924 = vadd.f32 %v918, %v922
        %v925 = vadd.f32 %v919, %v922
        %v926 = vld [vmem:[#allocation8] sm:$0xf]
        %v927 = vld [vmem:[#allocation8 + $0x4] sm:$0xf]
        %v928 = vld [vmem:[#allocation8 + $0x8] sm:$0xf]
        %v929 = vld [vmem:[#allocation8 + $0xc] sm:$0xf]
        %v930 = vld [vmem:[#allocation8 + $0x10] sm:$0xf]
        %v931 = vld [vmem:[#allocation8 + $0x14] sm:$0xf]
        %v932 = vld [vmem:[#allocation8 + $0x18] sm:$0xf]
        %v933 = vld [vmem:[#allocation8 + $0x1c] sm:$0xf]
        %v942 = vunpack.c.l.b16 %v926
        %v943 = vunpack.c.l.b16 %v927
        %v944 = vunpack.c.l.b16 %v928
        %v945 = vunpack.c.l.b16 %v929
        %v946 = vunpack.c.l.b16 %v930
        %v947 = vunpack.c.l.b16 %v931
        %v948 = vunpack.c.l.b16 %v932
        %v949 = vunpack.c.l.b16 %v933
        %v950 = vpack.c.b16 %v943, %v942
        %v951 = vpack.c.b16 %v945, %v944
        %v952 = vpack.c.b16 %v947, %v946
        %v953 = vpack.c.b16 %v949, %v948
        %958 = vmatpush.bf16.msra.mxu0 0
        %959 = vmatpush.bf16.msra.mxu0 0
        %960 = vmatpush.bf16.msra.mxu0 0
        %961 = vmatpush.bf16.msra.mxu0 0
        %962 = vmatpush.bf16.msra.mxu0 %v953
        %963 = vmatpush.bf16.msra.mxu0 %v952
        %964 = vmatpush.bf16.msra.mxu0 %v951
        %965 = vmatpush.bf16.msra.mxu0 %v950
        %966 = vmatmul.bf16.gmra.mxu0 %v537
        %v967 = vpop.f32.mrf.mxu0
        %v968 = vadd.f32 0.0, %v967
        %v969 = vpop.f32.mrf.mxu0
        %v970 = vadd.f32 0.0, %v969
        %971 = vdwg.mxu0
        %v972 = vld [vmem:[%s8] sm:$0x1]
        %v974 = vperm.slane %v972, 0
        %v976 = vmul.f32 %v968, %v974
        %v977 = vmul.f32 %v970, %v974
        %v978 = vld [vmem:[%s9] sm:$0x1]
        %v980 = vperm.slane %v978, 0
        %v982 = vadd.f32 %v976, %v980
        %v983 = vadd.f32 %v977, %v980
        %v984 = vadd.f32 %v924, %v982
        %v985 = vadd.f32 %v925, %v983
        %v986 = vmax.f32 %v984, 0.0
        %v987 = vmax.f32 %v985, 0.0
        %988 = vst [vmem:[%s429] sm:$0xff] %v986
        %989 = vst [vmem:[%s429 + $0x8] sm:$0xff] %v987
        %s990 = sand.u32 %s252, 1
        %s991 = scalar_lea.sflag [#allocation4], %s990
        %s992 = sand.u32 %s252, 1
        %s993 = smul.addr %s992, 16
        %s994 = scalar_lea.vmem [#allocation10], %s993
        // Predicated region
        $region77: #{tpu_custom_call.1} parent=59 // pred_check
          %p995 = pneg %p262
        $region78: #{tpu_custom_call.1} parent=59 // pred_check_branch
          %997 = sbr.rel (%p995) target = $region80
        $region79: #{tpu_custom_call.1} parent=59 // pred_region
          %999 = vsyncadd %s991, 0
          %s1000 = smul.addr %s29, 2
          %s1001 = smul.addr %s1000, 8
          %s1002 = scalar_lea.hbm %s10, %s1001
          %s1003 = sshll.u32 %s994, 4
          %s1004 = int_to_ptr.vmem [resolvable:$true] %s1003
          %s1005 = sshll.u32 %s1002, 4
          %s1006 = int_to_ptr.hbm [resolvable:$true] %s1005
          %1011 = dma.vmem_to_hbm [thread:$0]  %s1004, 256, %s1006, %s991, 128, 128, 8
        $region80: #{tpu_custom_call.1} parent=59 // pred_fallthru
          _
      $region60: #{tpu_custom_call.1} parent=5 // pred_fallthru
        _
      %p1012 = scmp.le.s32.totalorder 2, %s24
      // Predicated region
      $region81: #{tpu_custom_call.1} parent=5 // pred_check
        %p1013 = pneg %p1012
      $region82: #{tpu_custom_call.1} parent=5 // pred_check_branch
        %1015 = sbr.rel (%p1013) target = $region84
      $region83: #{tpu_custom_call.1} parent=5 // pred_region
        %s1016 = ssub.s32 %s24, 2
        // Predicated region
        $region85: #{tpu_custom_call.1} parent=83 // pred_check
          %p1017 = pneg %p268
        $region86: #{tpu_custom_call.1} parent=83 // pred_check_branch
          %1019 = sbr.rel (%p1017) target = $region88
        $region87: #{tpu_custom_call.1} parent=83 // pred_region
          %s1020 = sand.u32 %s253, 1
          %s1021 = scalar_lea.sflag [#allocation4], %s1020
          %s1022 = sand.u32 %s253, 1
          %s1023 = smul.addr %s1022, 16
          %s1024 = scalar_lea.vmem [#allocation10], %s1023
          %1026 = dma.done %s1021, 256
        $region88: #{tpu_custom_call.1} parent=83 // pred_fallthru
          _
      $region84: #{tpu_custom_call.1} parent=5 // pred_fallthru
        _
    $region6: #{tpu_custom_call.1} parent=1 // loop_footer
      %s28 = sadd.s32 1, %s24
    $region7: #{tpu_custom_call.1} parent=1 // loop_footer_branch
      %23 = sbr.rel target = $region3
    $region8: #{tpu_custom_call.1} parent=1 // loop_exit
      _
    %1027 = vsyncpa [#allocation3], 1
    %s1028 = scalar_lea.sflag [#allocation3], 1
    %1029 = vsyncpa %s1028, 1
    %1030 = vsyncpa [#allocation6], 1
    %1031 = vsyncpa [#allocation9], 1
    %1032 = vsyncpa [#allocation4], 1
    %s1033 = scalar_lea.sflag [#allocation4], 1
    %1034 = vsyncpa %s1033, 1

</llo_original>
